<compile_context>
chip_gen: v7x
topology: tpu7x:2x2x1
jax: 0.10.0
libtpu: 0.0.40
codegen_flags: <defaults>
</compile_context>

<pallas_src>
import functools
import math

import jax
import jax.numpy as jnp
from jax.experimental import pallas as pl
from jax.experimental.pallas import tpu as pltpu


def _round_up(a: int, m: int) -> int:
    return ((a + m - 1) // m) * m


# --------------------------------------------------------------------------
# Pass 1:  XW = x @ weight    (grid = (rows, F_out blocks, F_in contraction))
# --------------------------------------------------------------------------
def _xw_kernel(x_ref, w_ref, xw_ref, acc_ref):
    f = pl.program_id(2)

    @pl.when(f == 0)
    def _init():
        acc_ref[...] = jnp.zeros_like(acc_ref)

    acc_ref[...] += jnp.dot(x_ref[...], w_ref[...],
                            preferred_element_type=jnp.float32)

    @pl.when(f == pl.num_programs(2) - 1)
    def _store():
        xw_ref[...] = acc_ref[...].astype(xw_ref.dtype)


# --------------------------------------------------------------------------
# Pass 2:  out = lap @ XW     (grid = (out rows, F_out blocks, N contraction))
# --------------------------------------------------------------------------
def _agg_kernel(lap_ref, xw_ref, o_ref, acc_ref, *, n_valid, tk, mask_k):
    k = pl.program_id(2)

    @pl.when(k == 0)
    def _init():
        acc_ref[...] = jnp.zeros_like(acc_ref)

    lap_t = lap_ref[...]
    if mask_k:
        # lap is not padded in HBM: the last k tile can read past column
        # n_valid (undefined values).  Zero those columns so they can never
        # contaminate valid accumulator rows (garbage *rows* only affect
        # output rows that are discarded on writeback, so they need no mask).
        col = k * tk + jax.lax.broadcasted_iota(jnp.int32, lap_t.shape, 1)
        lap_t = jnp.where(col < n_valid, lap_t, jnp.zeros_like(lap_t))

    acc_ref[...] += jnp.dot(lap_t, xw_ref[...],
                            preferred_element_type=jnp.float32)

    @pl.when(k == pl.num_programs(2) - 1)
    def _store():
        o_ref[...] = acc_ref[...].astype(o_ref.dtype)


# --------------------------------------------------------------------------
# Wrapper
# --------------------------------------------------------------------------
def gcn_layer(x, lap, weight, *, lap_dtype=jnp.bfloat16,
              block_m=512, block_k=512, block_n=2048):
    """output = lap @ (x @ weight)  (GCNLayer.forward, bias unused)."""
    N, F_in = x.shape
    F_out = weight.shape[1]
    assert lap.shape == (N, N), lap.shape
    assert weight.shape == (F_in, F_out), weight.shape

    out_dtype = x.dtype

    # bf16 lap stream by default: halves the dominant N^2 HBM read and keeps
    # the aggregation matmul on the bf16 MXU fast path.  Prefer passing lap
    # already in bf16 (it is constant across GCN layers); this cast is a
    # one-time fallback.
    if lap_dtype is not None and lap.dtype != jnp.dtype(lap_dtype):
        lap = lap.astype(lap_dtype)
    stream_dtype = lap.dtype

    def _isz(dt):
        return jnp.dtype(dt).itemsize

    # ---- tile sizes (lane-dense, 128 multiples) ----------------------------
    fn_lane = _round_up(F_out, 128)
    bn = _round_up(block_n, 128)
    tn = fn_lane if fn_lane <= bn else bn          # single F_out block if it fits
    fn = _round_up(F_out, tn)

    tf = min(512, _round_up(F_in, 128))            # F_in contraction tile
    fi = _round_up(F_in, tf)

    tk = min(_round_up(block_k, 128), _round_up(N, 128))   # N contraction tile
    nk = _round_up(N, tk)

    tm = min(_round_up(block_m, 128), _round_up(N, 128))   # output row tile
    # v7x megacore: keep >= 2 parallel row blocks whenever N allows splitting.
    if pl.cdiv(N, tm) < 2 and N > 128:
        tm = _round_up(pl.cdiv(N, 2), 128)

    # ---- pad ONLY the small operands (x, weight); lap streams unpadded -----
    if (nk, fi) != (N, F_in):
        x = jnp.pad(x, ((0, nk - N), (0, fi - F_in)))
    if (fi, fn) != (F_in, F_out):
        weight = jnp.pad(weight, ((0, fi - F_in), (0, fn - F_out)))

    # 48 MiB cap leaves headroom on v7x (64 MiB physical per TC) and is more
    # than enough for these tiles on v5e/v6e.
    def _vmem_limit(est):
        return int(min(max(2 * est, 32 * 1024 * 1024), 48 * 1024 * 1024))

    # ------------------------------ pass 1 ----------------------------------
    grid1 = (nk // tk, fn // tn, fi // tf)
    vmem1 = _vmem_limit(
        2 * (tk * tf * _isz(x.dtype) + tf * tn * _isz(weight.dtype)
             + tk * tn * _isz(stream_dtype))
        + tk * tn * 4)

    xw = pl.pallas_call(
        _xw_kernel,
        out_shape=jax.ShapeDtypeStruct((nk, fn), stream_dtype),
        grid_spec=pltpu.PrefetchScalarGridSpec(
            num_scalar_prefetch=0,
            grid=grid1,
            in_specs=[
                pl.BlockSpec((tk, tf), lambda i, j, f: (i, f)),   # x
                pl.BlockSpec((tf, tn), lambda i, j, f: (f, j)),   # weight
            ],
            out_specs=pl.BlockSpec((tk, tn), lambda i, j, f: (i, j)),
            scratch_shapes=[pltpu.VMEM((tk, tn), jnp.float32)],
        ),
        compiler_params=pltpu.CompilerParams(
            dimension_semantics=("parallel", "parallel", "arbitrary"),
            vmem_limit_bytes=vmem1,
        ),
        cost_estimate=pl.CostEstimate(
            flops=2 * nk * fi * fn,
            transcendentals=0,
            bytes_accessed=(nk * fi * _isz(x.dtype)
                            + fi * fn * _isz(weight.dtype)
                            + nk * fn * _isz(stream_dtype)),
        ),
    )(x, weight)

    # ------------------------------ pass 2 ----------------------------------
    grid2 = (pl.cdiv(N, tm), fn // tn, nk // tk)
    mask_k = (N % tk) != 0
    vmem2 = _vmem_limit(
        2 * (tm * tk * _isz(stream_dtype) + tk * tn * _isz(stream_dtype)
             + tm * tn * _isz(out_dtype))
        + tm * tn * 4)

    kernel2 = functools.partial(_agg_kernel, n_valid=N, tk=tk, mask_k=mask_k)

    out = pl.pallas_call(
        kernel2,
        out_shape=jax.ShapeDtypeStruct((N, F_out), out_dtype),
        grid_spec=pltpu.PrefetchScalarGridSpec(
            num_scalar_prefetch=0,
            grid=grid2,
            in_specs=[
                pl.BlockSpec((tm, tk), lambda i, j, k: (i, k)),   # lap (unpadded)
                pl.BlockSpec((tk, tn), lambda i, j, k: (k, j)),   # XW
            ],
            out_specs=pl.BlockSpec((tm, tn), lambda i, j, k: (i, j)),
            scratch_shapes=[pltpu.VMEM((tm, tn), jnp.float32)],
        ),
        compiler_params=pltpu.CompilerParams(
            dimension_semantics=("parallel", "parallel", "arbitrary"),
            vmem_limit_bytes=vmem2,
        ),
        cost_estimate=pl.CostEstimate(
            flops=2 * N * N * fn,
            transcendentals=0,
            bytes_accessed=(N * N * _isz(stream_dtype)
                            + nk * fn * _isz(stream_dtype)
                            + N * F_out * _isz(out_dtype)),
        ),
    )(lap, xw)

    return out


def _reference(x, lap, weight):
    xw = jax.lax.dot(x, weight, precision=jax.lax.Precision.HIGHEST)
    return jax.lax.dot(lap, xw, precision=jax.lax.Precision.HIGHEST)


if __name__ == "__main__":
    key = jax.random.PRNGKey(0)

    def make_case(case_key, n, f_in, f_out):
        k_x, k_lap, k_w = jax.random.split(case_key, 3)
        xv = jax.random.normal(k_x, (n, f_in), dtype=jnp.float32)
        a = jax.random.normal(k_lap, (n, n), dtype=jnp.float32)
        lapv = 0.5 * (a + a.T)                       # symmetric laplacian-like
        stdv = 1.0 / math.sqrt(f_out)                # reset_parameters: U(-stdv, stdv)
        wv = jax.random.uniform(k_w, (f_in, f_out), jnp.float32, -stdv, stdv)
        return xv, lapv, wv

    k1, k2, k3 = jax.random.split(key, 3)

    # Case 1: tiny module-consistent shapes, exact f32 path, single-tile grid.
    x, lap, w = make_case(k1, 8, 16, 32)
    out = jax.block_until_ready(gcn_layer(x, lap, w, lap_dtype=jnp.float32))
    ref = _reference(x, lap, w)
    assert out.shape == (8, 32)
    assert jnp.allclose(out, ref, atol=1e-3, rtol=1e-3), \
        float(jnp.max(jnp.abs(out - ref)))

    # Case 2: unaligned N -> multi-tile i/k grid with ragged (masked) lap
    # edges and no N^2 pad; default bf16 lap / XW stream.
    x, lap, w = make_case(k2, 300, 20, 96)
    out = jax.block_until_ready(gcn_layer(x, lap, w, block_m=128, block_k=128))
    assert out.shape == (300, 96)
    # Tight check against a reference using the same bf16 stream precision.
    xw_bf = jax.lax.dot(x, w, precision=jax.lax.Precision.HIGHEST
                        ).astype(jnp.bfloat16).astype(jnp.float32)
    ref_bf = jax.lax.dot(lap.astype(jnp.bfloat16).astype(jnp.float32), xw_bf,
                         precision=jax.lax.Precision.HIGHEST)
    assert jnp.allclose(out, ref_bf, atol=1e-2, rtol=1e-2), \
        float(jnp.max(jnp.abs(out - ref_bf)))
    # Loose sanity check against the full-f32 reference (bf16 stream rounding).
    ref = _reference(x, lap, w)
    assert jnp.allclose(out, ref, atol=1e-1, rtol=5e-2), \
        float(jnp.max(jnp.abs(out - ref)))

    # Case 3: aligned shapes, multi-block i/k, no masking path, bf16 stream.
    x, lap, w = make_case(k3, 512, 64, 128)
    out = jax.block_until_ready(gcn_layer(x, lap, w, block_m=256, block_k=256))
    ref = _reference(x, lap, w)
    assert out.shape == (512, 128)
    assert jnp.allclose(out, ref, atol=2e-1, rtol=5e-2), \
        float(jnp.max(jnp.abs(out - ref)))

    print("KERNEL_OK")
</pallas_src>

<mosaic_0001>
module attributes {stable_mosaic.version = 11 : i64} {
  func.func @_xw_kernel(%arg0: i32, %arg1: i32, %arg2: i32, %arg3: memref<128x128xf32, #tpu.memory_space<vmem>>, %arg4: memref<128x128xf32, #tpu.memory_space<vmem>>, %arg5: memref<128x128xf32, #tpu.memory_space<vmem>>, %arg6: memref<128x128xf32, #tpu.memory_space<vmem>>) attributes {dimension_semantics = [#tpu.dimension_semantics<parallel>, #tpu.dimension_semantics<parallel>, #tpu.dimension_semantics<arbitrary>], iteration_bounds = array<i64: 1, 1, 1>, scalar_prefetch = 0 : i64, scratch_operands = 1 : i64, tpu.core_type = #tpu.core_type<tc>, window_params = [{transform_indices = @transform_0, window_bounds = array<i64: 128, 128>}, {transform_indices = @transform_1, window_bounds = array<i64: 128, 128>}, {transform_indices = @transform_2, window_bounds = array<i64: 128, 128>}]} {
    %c0_i32 = arith.constant 0 : i32
    %0 = arith.cmpi eq, %arg2, %c0_i32 : i32
    %1 = arith.extui %0 : i1 to i32
    %c0_i32_0 = arith.constant 0 : i32
    %2 = arith.cmpi ne, %1, %c0_i32_0 : i32
    scf.if %2 {
      %cst_10 = arith.constant 0.000000e+00 : f32
      %12 = vector.broadcast %cst_10 : f32 to vector<128x128xf32>
      %c0_11 = arith.constant 0 : index
      %c0_12 = arith.constant 0 : index
      %13 = vector.load %arg6[%c0_11, %c0_12] : memref<128x128xf32, #tpu.memory_space<vmem>>, vector<128x128xf32>
      tpu.vector_store %arg6[%c0_11, %c0_12], %12 {strides = array<i32>} : memref<128x128xf32, #tpu.memory_space<vmem>>, vector<128x128xf32>,
    } else {
    }
    %c0 = arith.constant 0 : index
    %c0_1 = arith.constant 0 : index
    %3 = vector.load %arg6[%c0, %c0_1] : memref<128x128xf32, #tpu.memory_space<vmem>>, vector<128x128xf32>
    %c0_2 = arith.constant 0 : index
    %c0_3 = arith.constant 0 : index
    %4 = vector.load %arg3[%c0_2, %c0_3] : memref<128x128xf32, #tpu.memory_space<vmem>>, vector<128x128xf32>
    %c0_4 = arith.constant 0 : index
    %c0_5 = arith.constant 0 : index
    %5 = vector.load %arg4[%c0_4, %c0_5] : memref<128x128xf32, #tpu.memory_space<vmem>>, vector<128x128xf32>
    %cst = arith.constant dense<0.000000e+00> : vector<128x128xf32>
    %6 = tpu.matmul %4, %5, %cst {dimension_numbers = #tpu.dot_dimension_numbers<[1], [0], [0], [1], [0, 0, 1, 1], [], []>} : vector<128x128xf32>, vector<128x128xf32>, vector<128x128xf32> -> vector<128x128xf32>
    %7 = arith.addf %3, %6 : vector<128x128xf32>
    %c0_6 = arith.constant 0 : index
    %c0_7 = arith.constant 0 : index
    %8 = vector.load %arg6[%c0_6, %c0_7] : memref<128x128xf32, #tpu.memory_space<vmem>>, vector<128x128xf32>
    tpu.vector_store %arg6[%c0_6, %c0_7], %7 {strides = array<i32>} : memref<128x128xf32, #tpu.memory_space<vmem>>, vector<128x128xf32>,
    %c0_i32_8 = arith.constant 0 : i32
    %9 = arith.cmpi eq, %arg2, %c0_i32_8 : i32
    %10 = arith.extui %9 : i1 to i32
    %c0_i32_9 = arith.constant 0 : i32
    %11 = arith.cmpi ne, %10, %c0_i32_9 : i32
    scf.if %11 {
      %c0_10 = arith.constant 0 : index
      %c0_11 = arith.constant 0 : index
      %12 = vector.load %arg6[%c0_10, %c0_11] : memref<128x128xf32, #tpu.memory_space<vmem>>, vector<128x128xf32>
      %c0_12 = arith.constant 0 : index
      %c0_13 = arith.constant 0 : index
      %13 = vector.load %arg5[%c0_12, %c0_13] : memref<128x128xf32, #tpu.memory_space<vmem>>, vector<128x128xf32>
      tpu.vector_store %arg5[%c0_12, %c0_13], %12 {strides = array<i32>} : memref<128x128xf32, #tpu.memory_space<vmem>>, vector<128x128xf32>,
    } else {
    }
    return
  }
  func.func @transform_0(%arg0: i32, %arg1: i32, %arg2: i32) -> (i32, i32) {
    %c0_i32 = arith.constant 0 : i32
    return %arg0, %arg2 : i32, i32
  }
  func.func @transform_1(%arg0: i32, %arg1: i32, %arg2: i32) -> (i32, i32) {
    %c0_i32 = arith.constant 0 : i32
    return %arg2, %arg1 : i32, i32
  }
  func.func @transform_2(%arg0: i32, %arg1: i32, %arg2: i32) -> (i32, i32) {
    %c0_i32 = arith.constant 0 : i32
    return %arg0, %arg1 : i32, i32
  }
}

</mosaic_0001>

<llo_original>
// kernel: tpu_custom_call.1
$region0: #{tpu_custom_call.1}
  #allocation0 [shape = 'u32[]', space=smem, size = 0x4, offset = 0x4, fixed_abs, tag = 'smem constant byte address 0x4 - core index']
  #allocation1 [shape = 'u32[144,128]{1,0:T(1,128)}', space=vmem, size = 0x12000, scoped, tag = 'internal scratch']
  #allocation2 [shape = 'f32[128,128]{1,0:T(8,128)}', space=vmem, size = 0x10000, scoped, tag = 'scratch operand']
  %s0 = inlined_call_operand.hbm [shape: f32[128,128], index: 0, kind: input, shape index: {}]
  %s1 = inlined_call_operand.hbm [shape: f32[128,128], index: 1, kind: input, shape index: {}]
  %s2 = inlined_call_operand.hbm [shape: f32[128,128], index: 2, kind: output, shape index: {}]
  %s3 = sld [smem:[#allocation0]]
  $region34: #{tpu_custom_call.1} parent=0
    _
  %s5 = ssub.s32 1, %s3
  %s6 = scalar_select 0, %s5, %s3
  $region1: #{tpu_custom_call.1} parent=0
    #allocation3 [shape = 'u8[65536]{0}', space=vmem, size = 0x10000, scoped, tag = 'input window, operand 0, single buffered']
    #allocation4 [shape = 's32[1]{0}', space=sflag, size = 0x4, scoped, tag = 'scoped memory for tpu_custom_call.1']
    #allocation5 [shape = 's32[1]{0}', space=sflag, size = 0x4, scoped, tag = 'scoped memory for tpu_custom_call.1']
    #allocation6 [shape = 'u8[65536]{0}', space=vmem, size = 0x10000, scoped, tag = 'input window, operand 1, single buffered']
    #allocation7 [shape = 's32[1]{0}', space=sflag, size = 0x4, scoped, tag = 'scoped memory for tpu_custom_call.1']
    #allocation8 [shape = 'u8[65536]{0}', space=vmem, size = 0x10000, scoped, tag = 'output window, operand 0, single buffered']
    %7 = vsyncpa [#allocation4], 0
    %8 = vsyncpa [#allocation7], 0
    %9 = vsyncpa [#allocation5], 0
    // Predicated region
    $region2: #{tpu_custom_call.1} parent=1 // pred_check
      _
    $region3: #{tpu_custom_call.1} parent=1 // pred_check_branch
      %11 = sbr.rel (0) target = $region5
    $region4: #{tpu_custom_call.1} parent=1 // pred_region
      %s13 = ssub.s32 2048, 2048
      %14 = vsyncadd [#allocation4], %s13
      %s15 = sshll.u32 [#allocation3], 4
      %s16 = int_to_ptr.vmem [resolvable:$true] %s15
      %21 = dma.hbm_to_vmem [thread:$0]  %s0, 2048, %s16, [#allocation4], 128, 128, 8
    $region5: #{tpu_custom_call.1} parent=1 // pred_fallthru
      _
    // Predicated region
    $region6: #{tpu_custom_call.1} parent=1 // pred_check
      _
    $region7: #{tpu_custom_call.1} parent=1 // pred_check_branch
      %23 = sbr.rel (0) target = $region9
    $region8: #{tpu_custom_call.1} parent=1 // pred_region
      %s25 = ssub.s32 2048, 2048
      %26 = vsyncadd [#allocation7], %s25
      %s27 = sshll.u32 [#allocation6], 4
      %s28 = int_to_ptr.vmem [resolvable:$true] %s27
      %33 = dma.hbm_to_vmem [thread:$0]  %s1, 2048, %s28, [#allocation7], 128, 128, 8
    $region9: #{tpu_custom_call.1} parent=1 // pred_fallthru
      _
    // Predicated region
    $region10: #{tpu_custom_call.1} parent=1 // pred_check
      _
    $region11: #{tpu_custom_call.1} parent=1 // pred_check_branch
      %35 = sbr.rel (0) target = $region13
    $region12: #{tpu_custom_call.1} parent=1 // pred_region
      %36 = dma.done [#allocation4], 2048
    $region13: #{tpu_custom_call.1} parent=1 // pred_fallthru
      _
    // Predicated region
    $region14: #{tpu_custom_call.1} parent=1 // pred_check
      _
    $region15: #{tpu_custom_call.1} parent=1 // pred_check_branch
      %38 = sbr.rel (0) target = $region17
    $region16: #{tpu_custom_call.1} parent=1 // pred_region
      %39 = dma.done [#allocation7], 2048
    $region17: #{tpu_custom_call.1} parent=1 // pred_fallthru
      _
    %p40 = scmp.eq.s32.totalorder 0, 0
    // Predicated region
    $region18: #{tpu_custom_call.1} parent=1 // pred_check
      %p41 = pneg %p40
    $region19: #{tpu_custom_call.1} parent=1 // pred_check_branch
      %43 = sbr.rel (%p41) target = $region21
    $region20: #{tpu_custom_call.1} parent=1 // pred_region
      %44 = vst [vmem:[#allocation2] sm:$0xff] 0.0
      %45 = vst [vmem:[#allocation2 + $0x8] sm:$0xff] 0.0
      %46 = vst [vmem:[#allocation2 + $0x10] sm:$0xff] 0.0
      %47 = vst [vmem:[#allocation2 + $0x18] sm:$0xff] 0.0
      %48 = vst [vmem:[#allocation2 + $0x20] sm:$0xff] 0.0
      %49 = vst [vmem:[#allocation2 + $0x28] sm:$0xff] 0.0
      %50 = vst [vmem:[#allocation2 + $0x30] sm:$0xff] 0.0
      %51 = vst [vmem:[#allocation2 + $0x38] sm:$0xff] 0.0
      %52 = vst [vmem:[#allocation2 + $0x40] sm:$0xff] 0.0
      %53 = vst [vmem:[#allocation2 + $0x48] sm:$0xff] 0.0
      %54 = vst [vmem:[#allocation2 + $0x50] sm:$0xff] 0.0
      %55 = vst [vmem:[#allocation2 + $0x58] sm:$0xff] 0.0
      %56 = vst [vmem:[#allocation2 + $0x60] sm:$0xff] 0.0
      %57 = vst [vmem:[#allocation2 + $0x68] sm:$0xff] 0.0
      %58 = vst [vmem:[#allocation2 + $0x70] sm:$0xff] 0.0
      %59 = vst [vmem:[#allocation2 + $0x78] sm:$0xff] 0.0
    $region21: #{tpu_custom_call.1} parent=1 // pred_fallthru
      _
    %v60 = vld [vmem:[#allocation2] sm:$0xff]
    %v61 = vld [vmem:[#allocation2 + $0x8] sm:$0xff]
    %v62 = vld [vmem:[#allocation2 + $0x10] sm:$0xff]
    %v63 = vld [vmem:[#allocation2 + $0x18] sm:$0xff]
    %v64 = vld [vmem:[#allocation2 + $0x20] sm:$0xff]
    %v65 = vld [vmem:[#allocation2 + $0x28] sm:$0xff]
    %v66 = vld [vmem:[#allocation2 + $0x30] sm:$0xff]
    %v67 = vld [vmem:[#allocation2 + $0x38] sm:$0xff]
    %v68 = vld [vmem:[#allocation2 + $0x40] sm:$0xff]
    %v69 = vld [vmem:[#allocation2 + $0x48] sm:$0xff]
    %v70 = vld [vmem:[#allocation2 + $0x50] sm:$0xff]
    %v71 = vld [vmem:[#allocation2 + $0x58] sm:$0xff]
    %v72 = vld [vmem:[#allocation2 + $0x60] sm:$0xff]
    %v73 = vld [vmem:[#allocation2 + $0x68] sm:$0xff]
    %v74 = vld [vmem:[#allocation2 + $0x70] sm:$0xff]
    %v75 = vld [vmem:[#allocation2 + $0x78] sm:$0xff]
    %v76 = vld [vmem:[#allocation3] sm:$0xff]
    %v77 = vld [vmem:[#allocation3 + $0x8] sm:$0xff]
    %v78 = vld [vmem:[#allocation3 + $0x10] sm:$0xff]
    %v79 = vld [vmem:[#allocation3 + $0x18] sm:$0xff]
    %v80 = vld [vmem:[#allocation3 + $0x20] sm:$0xff]
    %v81 = vld [vmem:[#allocation3 + $0x28] sm:$0xff]
    %v82 = vld [vmem:[#allocation3 + $0x30] sm:$0xff]
    %v83 = vld [vmem:[#allocation3 + $0x38] sm:$0xff]
    %v84 = vld [vmem:[#allocation3 + $0x40] sm:$0xff]
    %v85 = vld [vmem:[#allocation3 + $0x48] sm:$0xff]
    %v86 = vld [vmem:[#allocation3 + $0x50] sm:$0xff]
    %v87 = vld [vmem:[#allocation3 + $0x58] sm:$0xff]
    %v88 = vld [vmem:[#allocation3 + $0x60] sm:$0xff]
    %v89 = vld [vmem:[#allocation3 + $0x68] sm:$0xff]
    %v90 = vld [vmem:[#allocation3 + $0x70] sm:$0xff]
    %v91 = vld [vmem:[#allocation3 + $0x78] sm:$0xff]
    %v92 = vld [vmem:[#allocation6] sm:$0xff]
    %v93 = vld [vmem:[#allocation6 + $0x8] sm:$0xff]
    %v94 = vld [vmem:[#allocation6 + $0x10] sm:$0xff]
    %v95 = vld [vmem:[#allocation6 + $0x18] sm:$0xff]
    %v96 = vld [vmem:[#allocation6 + $0x20] sm:$0xff]
    %v97 = vld [vmem:[#allocation6 + $0x28] sm:$0xff]
    %v98 = vld [vmem:[#allocation6 + $0x30] sm:$0xff]
    %v99 = vld [vmem:[#allocation6 + $0x38] sm:$0xff]
    %v100 = vld [vmem:[#allocation6 + $0x40] sm:$0xff]
    %v101 = vld [vmem:[#allocation6 + $0x48] sm:$0xff]
    %v102 = vld [vmem:[#allocation6 + $0x50] sm:$0xff]
    %v103 = vld [vmem:[#allocation6 + $0x58] sm:$0xff]
    %v104 = vld [vmem:[#allocation6 + $0x60] sm:$0xff]
    %v105 = vld [vmem:[#allocation6 + $0x68] sm:$0xff]
    %v106 = vld [vmem:[#allocation6 + $0x70] sm:$0xff]
    %v107 = vld [vmem:[#allocation6 + $0x78] sm:$0xff]
    %108 = vmatprep.subr.mxu0 0.0
    %109 = vmatpush1.msra.mxu0 %v92
    %110 = vmatprep.subr.mxu0 0.0
    %111 = vmatpush1.msra.mxu0 %v93
    %112 = vmatprep.subr.mxu0 0.0
    %113 = vmatpush1.msra.mxu0 %v94
    %114 = vmatprep.subr.mxu0 0.0
    %115 = vmatpush1.msra.mxu0 %v95
    %116 = vmatprep.subr.mxu0 0.0
    %117 = vmatpush1.msra.mxu0 %v96
    %118 = vmatprep.subr.mxu0 0.0
    %119 = vmatpush1.msra.mxu0 %v97
    %120 = vmatprep.subr.mxu0 0.0
    %121 = vmatpush1.msra.mxu0 %v98
    %122 = vmatprep.subr.mxu0 0.0
    %123 = vmatpush1.msra.mxu0 %v99
    %124 = vmatprep.subr.mxu0 0.0
    %125 = vmatpush1.msra.mxu0 %v100
    %126 = vmatprep.subr.mxu0 0.0
    %127 = vmatpush1.msra.mxu0 %v101
    %128 = vmatprep.subr.mxu0 0.0
    %129 = vmatpush1.msra.mxu0 %v102
    %130 = vmatprep.subr.mxu0 0.0
    %131 = vmatpush1.msra.mxu0 %v103
    %132 = vmatprep.subr.mxu0 0.0
    %133 = vmatpush1.msra.mxu0 %v104
    %134 = vmatprep.subr.mxu0 0.0
    %135 = vmatpush1.msra.mxu0 %v105
    %136 = vmatprep.subr.mxu0 0.0
    %137 = vmatpush1.msra.mxu0 %v106
    %138 = vmatprep.subr.mxu0 0.0
    %139 = vmatpush1.msra.mxu0 %v107
    %140 = vmatprep.subr.mxu0 0.0
    %141 = vmatpush1.msra.mxu0 0.0
    %142 = vmatprep.subr.mxu0 0.0
    %143 = vmatpush1.msra.mxu0 0.0
    %144 = vmatprep.subr.mxu0 0.0
    %145 = vmatpush1.msra.mxu0 0.0
    %146 = vmatprep.subr.mxu0 0.0
    %147 = vmatpush1.msra.mxu0 0.0
    %148 = vmatprep.subr.mxu0 0.0
    %149 = vmatpush1.msra.mxu0 0.0
    %150 = vmatprep.subr.mxu0 0.0
    %151 = vmatpush1.msra.mxu0 0.0
    %152 = vmatprep.subr.mxu0 0.0
    %153 = vmatpush1.msra.mxu0 0.0
    %154 = vmatprep.subr.mxu0 0.0
    %155 = vmatpush1.msra.mxu0 0.0
    %156 = vmatprep.subr.mxu0 0.0
    %157 = vmatpush1.msra.mxu0 0.0
    %158 = vmatprep.subr.mxu0 0.0
    %159 = vmatpush1.msra.mxu0 0.0
    %160 = vmatprep.subr.mxu0 0.0
    %161 = vmatpush1.msra.mxu0 0.0
    %162 = vmatprep.subr.mxu0 0.0
    %163 = vmatpush1.msra.mxu0 0.0
    %164 = vmatprep.subr.mxu0 0.0
    %165 = vmatpush1.msra.mxu0 0.0
    %166 = vmatprep.subr.mxu0 0.0
    %167 = vmatpush1.msra.mxu0 0.0
    %168 = vmatprep.subr.mxu0 0.0
    %169 = vmatpush1.msra.mxu0 0.0
    %170 = vmatprep.subr.mxu0 0.0
    %171 = vmatpush1.msra.mxu0 0.0
    %172 = vmatprep.mubr.f32.mxu0 0.0
    %173 = vmatmul.mubr.f32.gmra.mrb[0].mxu0 %v76
    %v174 = vpop.f32.mrb[0].mxu0
    %v175 = vadd.f32 0.0, %v174
    %v176 = vpop.f32.mrb[0].mxu0
    %177 = vmatprep.mubr.f32.mxu0 0.0
    %178 = vmatmul.mubr.f32.gmra.mrb[0].mxu0 %v77
    %v179 = vpop.f32.mrb[0].mxu0
    %v180 = vadd.f32 0.0, %v179
    %v181 = vpop.f32.mrb[0].mxu0
    %182 = vmatprep.mubr.f32.mxu0 0.0
    %183 = vmatmul.mubr.f32.gmra.mrb[0].mxu0 %v78
    %v184 = vpop.f32.mrb[0].mxu0
    %v185 = vadd.f32 0.0, %v184
    %v186 = vpop.f32.mrb[0].mxu0
    %187 = vmatprep.mubr.f32.mxu0 0.0
    %188 = vmatmul.mubr.f32.gmra.mrb[0].mxu0 %v79
    %v189 = vpop.f32.mrb[0].mxu0
    %v190 = vadd.f32 0.0, %v189
    %v191 = vpop.f32.mrb[0].mxu0
    %192 = vmatprep.mubr.f32.mxu0 0.0
    %193 = vmatmul.mubr.f32.gmra.mrb[0].mxu0 %v80
    %v194 = vpop.f32.mrb[0].mxu0
    %v195 = vadd.f32 0.0, %v194
    %v196 = vpop.f32.mrb[0].mxu0
    %197 = vmatprep.mubr.f32.mxu0 0.0
    %198 = vmatmul.mubr.f32.gmra.mrb[0].mxu0 %v81
    %v199 = vpop.f32.mrb[0].mxu0
    %v200 = vadd.f32 0.0, %v199
    %v201 = vpop.f32.mrb[0].mxu0
    %202 = vmatprep.mubr.f32.mxu0 0.0
    %203 = vmatmul.mubr.f32.gmra.mrb[0].mxu0 %v82
    %v204 = vpop.f32.mrb[0].mxu0
    %v205 = vadd.f32 0.0, %v204
    %v206 = vpop.f32.mrb[0].mxu0
    %207 = vmatprep.mubr.f32.mxu0 0.0
    %208 = vmatmul.mubr.f32.gmra.mrb[0].mxu0 %v83
    %v209 = vpop.f32.mrb[0].mxu0
    %v210 = vadd.f32 0.0, %v209
    %v211 = vpop.f32.mrb[0].mxu0
    %212 = vmatprep.mubr.f32.mxu0 0.0
    %213 = vmatmul.mubr.f32.gmra.mrb[0].mxu0 %v84
    %v214 = vpop.f32.mrb[0].mxu0
    %v215 = vadd.f32 0.0, %v214
    %v216 = vpop.f32.mrb[0].mxu0
    %217 = vmatprep.mubr.f32.mxu0 0.0
    %218 = vmatmul.mubr.f32.gmra.mrb[0].mxu0 %v85
    %v219 = vpop.f32.mrb[0].mxu0
    %v220 = vadd.f32 0.0, %v219
    %v221 = vpop.f32.mrb[0].mxu0
    %222 = vmatprep.mubr.f32.mxu0 0.0
    %223 = vmatmul.mubr.f32.gmra.mrb[0].mxu0 %v86
    %v224 = vpop.f32.mrb[0].mxu0
    %v225 = vadd.f32 0.0, %v224
    %v226 = vpop.f32.mrb[0].mxu0
    %227 = vmatprep.mubr.f32.mxu0 0.0
    %228 = vmatmul.mubr.f32.gmra.mrb[0].mxu0 %v87
    %v229 = vpop.f32.mrb[0].mxu0
    %v230 = vadd.f32 0.0, %v229
    %v231 = vpop.f32.mrb[0].mxu0
    %232 = vmatprep.mubr.f32.mxu0 0.0
    %233 = vmatmul.mubr.f32.gmra.mrb[0].mxu0 %v88
    %v234 = vpop.f32.mrb[0].mxu0
    %v235 = vadd.f32 0.0, %v234
    %v236 = vpop.f32.mrb[0].mxu0
    %237 = vmatprep.mubr.f32.mxu0 0.0
    %238 = vmatmul.mubr.f32.gmra.mrb[0].mxu0 %v89
    %v239 = vpop.f32.mrb[0].mxu0
    %v240 = vadd.f32 0.0, %v239
    %v241 = vpop.f32.mrb[0].mxu0
    %242 = vmatprep.mubr.f32.mxu0 0.0
    %243 = vmatmul.mubr.f32.gmra.mrb[0].mxu0 %v90
    %v244 = vpop.f32.mrb[0].mxu0
    %v245 = vadd.f32 0.0, %v244
    %v246 = vpop.f32.mrb[0].mxu0
    %247 = vmatprep.mubr.f32.mxu0 0.0
    %248 = vmatmul.mubr.f32.gmra.mrb[0].mxu0 %v91
    %v249 = vpop.f32.mrb[0].mxu0
    %v250 = vadd.f32 0.0, %v249
    %v251 = vpop.f32.mrb[0].mxu0
    %252 = vdwg.mxu0
    %v253 = vadd.f32 %v60, %v175
    %v254 = vadd.f32 %v61, %v180
    %v255 = vadd.f32 %v62, %v185
    %v256 = vadd.f32 %v63, %v190
    %v257 = vadd.f32 %v64, %v195
    %v258 = vadd.f32 %v65, %v200
    %v259 = vadd.f32 %v66, %v205
    %v260 = vadd.f32 %v67, %v210
    %v261 = vadd.f32 %v68, %v215
    %v262 = vadd.f32 %v69, %v220
    %v263 = vadd.f32 %v70, %v225
    %v264 = vadd.f32 %v71, %v230
    %v265 = vadd.f32 %v72, %v235
    %v266 = vadd.f32 %v73, %v240
    %v267 = vadd.f32 %v74, %v245
    %v268 = vadd.f32 %v75, %v250
    %269 = vst [vmem:[#allocation2] sm:$0xff] %v253
    %270 = vst [vmem:[#allocation2 + $0x8] sm:$0xff] %v254
    %271 = vst [vmem:[#allocation2 + $0x10] sm:$0xff] %v255
    %272 = vst [vmem:[#allocation2 + $0x18] sm:$0xff] %v256
    %273 = vst [vmem:[#allocation2 + $0x20] sm:$0xff] %v257
    %274 = vst [vmem:[#allocation2 + $0x28] sm:$0xff] %v258
    %275 = vst [vmem:[#allocation2 + $0x30] sm:$0xff] %v259
    %276 = vst [vmem:[#allocation2 + $0x38] sm:$0xff] %v260
    %277 = vst [vmem:[#allocation2 + $0x40] sm:$0xff] %v261
    %278 = vst [vmem:[#allocation2 + $0x48] sm:$0xff] %v262
    %279 = vst [vmem:[#allocation2 + $0x50] sm:$0xff] %v263
    %280 = vst [vmem:[#allocation2 + $0x58] sm:$0xff] %v264
    %281 = vst [vmem:[#allocation2 + $0x60] sm:$0xff] %v265
    %282 = vst [vmem:[#allocation2 + $0x68] sm:$0xff] %v266
    %283 = vst [vmem:[#allocation2 + $0x70] sm:$0xff] %v267
    %284 = vst [vmem:[#allocation2 + $0x78] sm:$0xff] %v268
    // Predicated region
    $region22: #{tpu_custom_call.1} parent=1 // pred_check
      %p285 = pneg %p40
    $region23: #{tpu_custom_call.1} parent=1 // pred_check_branch
      %287 = sbr.rel (%p285) target = $region25
    $region24: #{tpu_custom_call.1} parent=1 // pred_region
      %v288 = vld [vmem:[#allocation2] sm:$0xff]
      %v289 = vld [vmem:[#allocation2 + $0x8] sm:$0xff]
      %v290 = vld [vmem:[#allocation2 + $0x10] sm:$0xff]
      %v291 = vld [vmem:[#allocation2 + $0x18] sm:$0xff]
      %v292 = vld [vmem:[#allocation2 + $0x20] sm:$0xff]
      %v293 = vld [vmem:[#allocation2 + $0x28] sm:$0xff]
      %v294 = vld [vmem:[#allocation2 + $0x30] sm:$0xff]
      %v295 = vld [vmem:[#allocation2 + $0x38] sm:$0xff]
      %v296 = vld [vmem:[#allocation2 + $0x40] sm:$0xff]
      %v297 = vld [vmem:[#allocation2 + $0x48] sm:$0xff]
      %v298 = vld [vmem:[#allocation2 + $0x50] sm:$0xff]
      %v299 = vld [vmem:[#allocation2 + $0x58] sm:$0xff]
      %v300 = vld [vmem:[#allocation2 + $0x60] sm:$0xff]
      %v301 = vld [vmem:[#allocation2 + $0x68] sm:$0xff]
      %v302 = vld [vmem:[#allocation2 + $0x70] sm:$0xff]
      %v303 = vld [vmem:[#allocation2 + $0x78] sm:$0xff]
      %304 = vst [vmem:[#allocation8] sm:$0xff] %v288
      %305 = vst [vmem:[#allocation8 + $0x8] sm:$0xff] %v289
      %306 = vst [vmem:[#allocation8 + $0x10] sm:$0xff] %v290
      %307 = vst [vmem:[#allocation8 + $0x18] sm:$0xff] %v291
      %308 = vst [vmem:[#allocation8 + $0x20] sm:$0xff] %v292
      %309 = vst [vmem:[#allocation8 + $0x28] sm:$0xff] %v293
      %310 = vst [vmem:[#allocation8 + $0x30] sm:$0xff] %v294
      %311 = vst [vmem:[#allocation8 + $0x38] sm:$0xff] %v295
      %312 = vst [vmem:[#allocation8 + $0x40] sm:$0xff] %v296
      %313 = vst [vmem:[#allocation8 + $0x48] sm:$0xff] %v297
      %314 = vst [vmem:[#allocation8 + $0x50] sm:$0xff] %v298
      %315 = vst [vmem:[#allocation8 + $0x58] sm:$0xff] %v299
      %316 = vst [vmem:[#allocation8 + $0x60] sm:$0xff] %v300
      %317 = vst [vmem:[#allocation8 + $0x68] sm:$0xff] %v301
      %318 = vst [vmem:[#allocation8 + $0x70] sm:$0xff] %v302
      %319 = vst [vmem:[#allocation8 + $0x78] sm:$0xff] %v303
    $region25: #{tpu_custom_call.1} parent=1 // pred_fallthru
      _
    // Predicated region
    $region26: #{tpu_custom_call.1} parent=1 // pred_check
      _
    $region27: #{tpu_custom_call.1} parent=1 // pred_check_branch
      %321 = sbr.rel (0) target = $region29
    $region28: #{tpu_custom_call.1} parent=1 // pred_region
      %s323 = ssub.s32 2048, 2048
      %324 = vsyncadd [#allocation5], %s323
      %s325 = sshll.u32 [#allocation8], 4
      %s326 = int_to_ptr.vmem [resolvable:$true] %s325
      %331 = dma.vmem_to_hbm [thread:$0]  %s326, 2048, %s2, [#allocation5], 128, 128, 8
    $region29: #{tpu_custom_call.1} parent=1 // pred_fallthru
      _
    // Predicated region
    $region30: #{tpu_custom_call.1} parent=1 // pred_check
      _
    $region31: #{tpu_custom_call.1} parent=1 // pred_check_branch
      %333 = sbr.rel (0) target = $region33
    $region32: #{tpu_custom_call.1} parent=1 // pred_region
      %334 = dma.done [#allocation5], 2048
    $region33: #{tpu_custom_call.1} parent=1 // pred_fallthru
      _
    %335 = vsyncpa [#allocation4], 1
    %336 = vsyncpa [#allocation7], 1
    %337 = vsyncpa [#allocation5], 1

</llo_original>
